<compile_context>
chip_gen: v5e
topology: v5e:2x2
jax: 0.10.0
libtpu: 0.0.40
codegen_flags: <defaults>
</compile_context>

<pallas_src>
import functools

import jax
import jax.numpy as jnp
from jax.experimental import pallas as pl
from jax.experimental.pallas import tpu as pltpu


def _lowrank_matmul_kernel(w_ref, b_ref, o_ref, *, use_vpu):
    # w_ref: (TM, K), b_ref: (K, TD), o_ref: (TM, TD)
    w = w_ref[...]
    b = b_ref[...]
    if use_vpu:
        # K is tiny (num_bases ~ 3): unrolled broadcast-FMA on the VPU.
        k_dim = w.shape[1]
        acc = w[:, 0:1].astype(jnp.float32) * b[0:1, :].astype(jnp.float32)
        for k in range(1, k_dim):
            acc = acc + (
                w[:, k:k + 1].astype(jnp.float32) * b[k:k + 1, :].astype(jnp.float32)
            )
    else:
        acc = jnp.dot(w, b, preferred_element_type=jnp.float32)
    o_ref[...] = acc.astype(o_ref.dtype)


def _matmul_2d(w, b, out_dtype):
    """(M, K) @ (K, D) -> (M, D) via Pallas, tiled over M and D."""
    M, K = w.shape
    K2, D = b.shape
    assert K == K2

    # Row tile: large (amortizes ~0.35 us/step grid overhead), multiple of 8,
    # or the full dim when M is small (a full-dim block is always legal).
    TM = 512 if M >= 512 else M
    # Lane tile: multiple of 128 when possible, otherwise the full dim.
    TD = min(D, 2048) if (D % 128 == 0) else D

    grid = (pl.cdiv(M, TM), pl.cdiv(D, TD))
    kernel = functools.partial(_lowrank_matmul_kernel, use_vpu=(K <= 16))

    return pl.pallas_call(
        kernel,
        out_shape=jax.ShapeDtypeStruct((M, D), out_dtype),
        grid=grid,
        in_specs=[
            pl.BlockSpec((TM, K), lambda i, j: (i, 0)),   # weight row tile
            pl.BlockSpec((K, TD), lambda i, j: (0, j)),   # bases D-slab
        ],
        out_specs=pl.BlockSpec((TM, TD), lambda i, j: (i, j)),
        compiler_params=pltpu.CompilerParams(
            dimension_semantics=("parallel", "parallel"),
            # Max tiles (512 x 2048 f32, double-buffered) need ~12 MiB; 48 MiB
            # scoped limit is safe on v5e/v6e (128 MiB) and v7x (64 MiB).
            vmem_limit_bytes=48 * 1024 * 1024,
        ),
    )(w, b)


def lowrank_embedding_forward(weight, bases, indices=None, *, shape, out_dtype=None):
    """Pallas forward for LowRankEmbeddingRepresentation.

    weight : (max_id, num_bases) float32
    bases  : (num_bases, *shape) float32
    indices: optional int array of any shape (values in [0, max_id))
    returns: (*prefix, *shape) where prefix = (max_id,) if indices is None
             else indices.shape
    """
    max_id, num_bases = weight.shape
    D = 1
    for s in shape:
        D *= int(s)
    bases_flat = bases.reshape(num_bases, D)
    out_dtype = weight.dtype if out_dtype is None else out_dtype

    if indices is None:
        prefix = (max_id,)
        w_sel = weight
    else:
        prefix = tuple(indices.shape)
        # TODO(synk): gather kept as XLA glue (jnp.take). w_sel is only (M, num_bases)
        # floats, so fusing it via scalar prefetch buys little vs. the (M, D) output
        # traffic that dominates this store-bound op.
        w_sel = jnp.take(weight, indices.reshape(-1).astype(jnp.int32), axis=0)

    M, K = w_sel.shape

    # Lane-dense path for narrow outputs (D < 128): group G rows so the kernel
    # stores full 128-lane blocks (unmasked vst) instead of masked partial stores.
    if 0 < D < 128 and 128 % D == 0 and M >= (128 // D) and M % (128 // D) == 0:
        G = 128 // D
        w_grp = w_sel.reshape(M // G, G * K)                               # free, row-major
        b_grp = jnp.kron(jnp.eye(G, dtype=bases_flat.dtype), bases_flat)   # (G*K, 128)
        out = _matmul_2d(w_grp, b_grp, out_dtype)                          # (M//G, 128)
    else:
        out = _matmul_2d(w_sel, bases_flat, out_dtype)                     # (M, D)

    return out.reshape(*prefix, *shape)


def init_params(key, *, max_id, shape, num_bases):
    """Deterministic parameter init mirroring the module's __init__.

    - bases Embedding default initializer: normal_ (std normal)
    - weight: uniform_norm_p1_ = uniform(0,1) then L1-normalize along last dim
    """
    k_b, k_w = jax.random.split(key)
    bases = jax.random.normal(k_b, (num_bases, *shape), dtype=jnp.float32)
    w = jax.random.uniform(k_w, (max_id, num_bases), dtype=jnp.float32)
    w = w / jnp.sum(jnp.abs(w), axis=-1, keepdims=True)
    return w, bases


if __name__ == "__main__":
    max_id = 16
    shape = (4, 8)      # per-representation shape -> D = 32
    num_bases = 3

    key = jax.random.PRNGKey(0)
    weight, bases = init_params(key, max_id=max_id, shape=shape, num_bases=num_bases)

    # Case 1: indices=None -> (max_id, *shape). M=16, G=4 -> lane-dense kron path.
    out_all = jax.block_until_ready(
        lowrank_embedding_forward(weight, bases, None, shape=shape)
    )
    ref_all = jnp.tensordot(weight, bases, axes=([-1], [0]))
    assert out_all.shape == (max_id, *shape)
    assert jnp.allclose(out_all, ref_all, atol=1e-5, rtol=1e-5)

    # Case 2: 2-D indices -> (*indices.shape, *shape). M=6 -> general tiled path.
    indices = jax.random.randint(
        jax.random.PRNGKey(1), (2, 3), 0, max_id, dtype=jnp.int32
    )
    out_idx = jax.block_until_ready(
        lowrank_embedding_forward(weight, bases, indices, shape=shape)
    )
    ref_idx = jnp.tensordot(weight[indices], bases, axes=([-1], [0]))
    assert out_idx.shape == (2, 3, *shape)
    assert jnp.allclose(out_idx, ref_idx, atol=1e-5, rtol=1e-5)

    print("KERNEL_OK")
</pallas_src>

<mosaic_0001>
module attributes {stable_mosaic.version = 11 : i64} {
  func.func @_lowrank_matmul_kernel(%arg0: i32, %arg1: i32, %arg2: memref<4x12xf32, #tpu.memory_space<vmem>>, %arg3: memref<12x128xf32, #tpu.memory_space<vmem>>, %arg4: memref<4x128xf32, #tpu.memory_space<vmem>>) attributes {dimension_semantics = [#tpu.dimension_semantics<parallel>, #tpu.dimension_semantics<parallel>], iteration_bounds = array<i64: 1, 1>, scalar_prefetch = 0 : i64, scratch_operands = 0 : i64, tpu.core_type = #tpu.core_type<tc>, window_params = [{transform_indices = @transform_0, window_bounds = array<i64: 4, 12>}, {transform_indices = @transform_1, window_bounds = array<i64: 12, 128>}, {transform_indices = @transform_2, window_bounds = array<i64: 4, 128>}]} {
    %c0 = arith.constant 0 : index
    %c0_0 = arith.constant 0 : index
    %0 = vector.load %arg2[%c0, %c0_0] : memref<4x12xf32, #tpu.memory_space<vmem>>, vector<4x12xf32>
    %c0_1 = arith.constant 0 : index
    %c0_2 = arith.constant 0 : index
    %1 = vector.load %arg3[%c0_1, %c0_2] : memref<12x128xf32, #tpu.memory_space<vmem>>, vector<12x128xf32>
    %2 = vector.extract_strided_slice %0 {offsets = [0, 0], sizes = [4, 1], strides = [1, 1]} : vector<4x12xf32> to vector<4x1xf32>
    %3 = vector.extract_strided_slice %1 {offsets = [0, 0], sizes = [1, 128], strides = [1, 1]} : vector<12x128xf32> to vector<1x128xf32>
    %4 = vector.broadcast %2 : vector<4x1xf32> to vector<4x128xf32>
    %5 = vector.broadcast %3 : vector<1x128xf32> to vector<4x128xf32>
    %6 = arith.mulf %4, %5 : vector<4x128xf32>
    %7 = vector.extract_strided_slice %0 {offsets = [0, 1], sizes = [4, 1], strides = [1, 1]} : vector<4x12xf32> to vector<4x1xf32>
    %8 = vector.extract_strided_slice %1 {offsets = [1, 0], sizes = [1, 128], strides = [1, 1]} : vector<12x128xf32> to vector<1x128xf32>
    %9 = vector.broadcast %7 : vector<4x1xf32> to vector<4x128xf32>
    %10 = vector.broadcast %8 : vector<1x128xf32> to vector<4x128xf32>
    %11 = arith.mulf %9, %10 : vector<4x128xf32>
    %12 = arith.addf %6, %11 : vector<4x128xf32>
    %13 = vector.extract_strided_slice %0 {offsets = [0, 2], sizes = [4, 1], strides = [1, 1]} : vector<4x12xf32> to vector<4x1xf32>
    %14 = vector.extract_strided_slice %1 {offsets = [2, 0], sizes = [1, 128], strides = [1, 1]} : vector<12x128xf32> to vector<1x128xf32>
    %15 = vector.broadcast %13 : vector<4x1xf32> to vector<4x128xf32>
    %16 = vector.broadcast %14 : vector<1x128xf32> to vector<4x128xf32>
    %17 = arith.mulf %15, %16 : vector<4x128xf32>
    %18 = arith.addf %12, %17 : vector<4x128xf32>
    %19 = vector.extract_strided_slice %0 {offsets = [0, 3], sizes = [4, 1], strides = [1, 1]} : vector<4x12xf32> to vector<4x1xf32>
    %20 = vector.extract_strided_slice %1 {offsets = [3, 0], sizes = [1, 128], strides = [1, 1]} : vector<12x128xf32> to vector<1x128xf32>
    %21 = vector.broadcast %19 : vector<4x1xf32> to vector<4x128xf32>
    %22 = vector.broadcast %20 : vector<1x128xf32> to vector<4x128xf32>
    %23 = arith.mulf %21, %22 : vector<4x128xf32>
    %24 = arith.addf %18, %23 : vector<4x128xf32>
    %25 = vector.extract_strided_slice %0 {offsets = [0, 4], sizes = [4, 1], strides = [1, 1]} : vector<4x12xf32> to vector<4x1xf32>
    %26 = vector.extract_strided_slice %1 {offsets = [4, 0], sizes = [1, 128], strides = [1, 1]} : vector<12x128xf32> to vector<1x128xf32>
    %27 = vector.broadcast %25 : vector<4x1xf32> to vector<4x128xf32>
    %28 = vector.broadcast %26 : vector<1x128xf32> to vector<4x128xf32>
    %29 = arith.mulf %27, %28 : vector<4x128xf32>
    %30 = arith.addf %24, %29 : vector<4x128xf32>
    %31 = vector.extract_strided_slice %0 {offsets = [0, 5], sizes = [4, 1], strides = [1, 1]} : vector<4x12xf32> to vector<4x1xf32>
    %32 = vector.extract_strided_slice %1 {offsets = [5, 0], sizes = [1, 128], strides = [1, 1]} : vector<12x128xf32> to vector<1x128xf32>
    %33 = vector.broadcast %31 : vector<4x1xf32> to vector<4x128xf32>
    %34 = vector.broadcast %32 : vector<1x128xf32> to vector<4x128xf32>
    %35 = arith.mulf %33, %34 : vector<4x128xf32>
    %36 = arith.addf %30, %35 : vector<4x128xf32>
    %37 = vector.extract_strided_slice %0 {offsets = [0, 6], sizes = [4, 1], strides = [1, 1]} : vector<4x12xf32> to vector<4x1xf32>
    %38 = vector.extract_strided_slice %1 {offsets = [6, 0], sizes = [1, 128], strides = [1, 1]} : vector<12x128xf32> to vector<1x128xf32>
    %39 = vector.broadcast %37 : vector<4x1xf32> to vector<4x128xf32>
    %40 = vector.broadcast %38 : vector<1x128xf32> to vector<4x128xf32>
    %41 = arith.mulf %39, %40 : vector<4x128xf32>
    %42 = arith.addf %36, %41 : vector<4x128xf32>
    %43 = vector.extract_strided_slice %0 {offsets = [0, 7], sizes = [4, 1], strides = [1, 1]} : vector<4x12xf32> to vector<4x1xf32>
    %44 = vector.extract_strided_slice %1 {offsets = [7, 0], sizes = [1, 128], strides = [1, 1]} : vector<12x128xf32> to vector<1x128xf32>
    %45 = vector.broadcast %43 : vector<4x1xf32> to vector<4x128xf32>
    %46 = vector.broadcast %44 : vector<1x128xf32> to vector<4x128xf32>
    %47 = arith.mulf %45, %46 : vector<4x128xf32>
    %48 = arith.addf %42, %47 : vector<4x128xf32>
    %49 = vector.extract_strided_slice %0 {offsets = [0, 8], sizes = [4, 1], strides = [1, 1]} : vector<4x12xf32> to vector<4x1xf32>
    %50 = vector.extract_strided_slice %1 {offsets = [8, 0], sizes = [1, 128], strides = [1, 1]} : vector<12x128xf32> to vector<1x128xf32>
    %51 = vector.broadcast %49 : vector<4x1xf32> to vector<4x128xf32>
    %52 = vector.broadcast %50 : vector<1x128xf32> to vector<4x128xf32>
    %53 = arith.mulf %51, %52 : vector<4x128xf32>
    %54 = arith.addf %48, %53 : vector<4x128xf32>
    %55 = vector.extract_strided_slice %0 {offsets = [0, 9], sizes = [4, 1], strides = [1, 1]} : vector<4x12xf32> to vector<4x1xf32>
    %56 = vector.extract_strided_slice %1 {offsets = [9, 0], sizes = [1, 128], strides = [1, 1]} : vector<12x128xf32> to vector<1x128xf32>
    %57 = vector.broadcast %55 : vector<4x1xf32> to vector<4x128xf32>
    %58 = vector.broadcast %56 : vector<1x128xf32> to vector<4x128xf32>
    %59 = arith.mulf %57, %58 : vector<4x128xf32>
    %60 = arith.addf %54, %59 : vector<4x128xf32>
    %61 = vector.extract_strided_slice %0 {offsets = [0, 10], sizes = [4, 1], strides = [1, 1]} : vector<4x12xf32> to vector<4x1xf32>
    %62 = vector.extract_strided_slice %1 {offsets = [10, 0], sizes = [1, 128], strides = [1, 1]} : vector<12x128xf32> to vector<1x128xf32>
    %63 = vector.broadcast %61 : vector<4x1xf32> to vector<4x128xf32>
    %64 = vector.broadcast %62 : vector<1x128xf32> to vector<4x128xf32>
    %65 = arith.mulf %63, %64 : vector<4x128xf32>
    %66 = arith.addf %60, %65 : vector<4x128xf32>
    %67 = vector.extract_strided_slice %0 {offsets = [0, 11], sizes = [4, 1], strides = [1, 1]} : vector<4x12xf32> to vector<4x1xf32>
    %68 = vector.extract_strided_slice %1 {offsets = [11, 0], sizes = [1, 128], strides = [1, 1]} : vector<12x128xf32> to vector<1x128xf32>
    %69 = vector.broadcast %67 : vector<4x1xf32> to vector<4x128xf32>
    %70 = vector.broadcast %68 : vector<1x128xf32> to vector<4x128xf32>
    %71 = arith.mulf %69, %70 : vector<4x128xf32>
    %72 = arith.addf %66, %71 : vector<4x128xf32>
    %c0_3 = arith.constant 0 : index
    %c0_4 = arith.constant 0 : index
    %73 = vector.load %arg4[%c0_3, %c0_4] : memref<4x128xf32, #tpu.memory_space<vmem>>, vector<4x128xf32>
    tpu.vector_store %arg4[%c0_3, %c0_4], %72 {strides = array<i32>} : memref<4x128xf32, #tpu.memory_space<vmem>>, vector<4x128xf32>,
    return
  }
  func.func @transform_0(%arg0: i32, %arg1: i32) -> (i32, i32) {
    %c0_i32 = arith.constant 0 : i32
    %c0_i32_0 = arith.constant 0 : i32
    return %arg0, %c0_i32 : i32, i32
  }
  func.func @transform_1(%arg0: i32, %arg1: i32) -> (i32, i32) {
    %c0_i32 = arith.constant 0 : i32
    %c0_i32_0 = arith.constant 0 : i32
    return %c0_i32, %arg1 : i32, i32
  }
  func.func @transform_2(%arg0: i32, %arg1: i32) -> (i32, i32) {
    %c0_i32 = arith.constant 0 : i32
    return %arg0, %arg1 : i32, i32
  }
}

</mosaic_0001>

<llo_original>
// kernel: tpu_custom_call.1
$region0: #{tpu_custom_call.1}
  #allocation0 [shape = 'u32[]', space=smem, size = 0x4, offset = 0x4, fixed_abs, tag = 'smem constant byte address 0x4 - core index']
  #allocation1 [shape = 'u32[72,128]{1,0:T(1,128)}', space=vmem, size = 0x9000, scoped, tag = 'internal scratch']
  %s0 = inlined_call_operand.hbm [shape: f32[4,12], index: 0, kind: input, shape index: {}]
  %s1 = inlined_call_operand.hbm [shape: f32[12,128], index: 1, kind: input, shape index: {}]
  %s2 = inlined_call_operand.hbm [shape: f32[4,128], index: 2, kind: output, shape index: {}]
  %s3 = sld [smem:[#allocation0]]
  $region26: #{tpu_custom_call.1} parent=0
    _
  %s5 = ssub.s32 1, %s3
  %s6 = scalar_select 0, %s5, %s3
  $region1: #{tpu_custom_call.1} parent=0
    #allocation2 [shape = 'u8[2048]{0}', space=vmem, size = 0x800, scoped, tag = 'input window, operand 0, single buffered']
    #allocation3 [shape = 's32[1]{0}', space=sflag, size = 0x4, scoped, tag = 'scoped memory for tpu_custom_call.1']
    #allocation4 [shape = 's32[1]{0}', space=sflag, size = 0x4, scoped, tag = 'scoped memory for tpu_custom_call.1']
    #allocation5 [shape = 'u8[8192]{0}', space=vmem, size = 0x2000, scoped, tag = 'input window, operand 1, single buffered']
    #allocation6 [shape = 's32[1]{0}', space=sflag, size = 0x4, scoped, tag = 'scoped memory for tpu_custom_call.1']
    #allocation7 [shape = 'u8[2048]{0}', space=vmem, size = 0x800, scoped, tag = 'output window, operand 0, single buffered']
    %7 = vsyncpa [#allocation3], 0
    %8 = vsyncpa [#allocation6], 0
    %9 = vsyncpa [#allocation4], 0
    // Predicated region
    $region2: #{tpu_custom_call.1} parent=1 // pred_check
      _
    $region3: #{tpu_custom_call.1} parent=1 // pred_check_branch
      %11 = sbr.rel (0) target = $region5
    $region4: #{tpu_custom_call.1} parent=1 // pred_region
      %13 = vsyncadd [#allocation3], 0
      %s15 = sshll.u32 %s0, 4
      %s16 = int_to_ptr.hbm [resolvable:$true] %s15
      %s17 = sshll.u32 [#allocation2], 4
      %s18 = int_to_ptr.vmem [resolvable:$true] %s17
      %20 = dma.hbm_to_vmem [thread:$0]  %s16, 64, %s18, [#allocation3]
    $region5: #{tpu_custom_call.1} parent=1 // pred_fallthru
      _
    // Predicated region
    $region6: #{tpu_custom_call.1} parent=1 // pred_check
      _
    $region7: #{tpu_custom_call.1} parent=1 // pred_check_branch
      %22 = sbr.rel (0) target = $region9
    $region8: #{tpu_custom_call.1} parent=1 // pred_region
      %24 = vsyncadd [#allocation6], 0
      %s25 = sshll.u32 %s1, 4
      %s26 = int_to_ptr.hbm [resolvable:$true] %s25
      %s27 = sshll.u32 [#allocation5], 4
      %s28 = int_to_ptr.vmem [resolvable:$true] %s27
      %33 = dma.hbm_to_vmem [thread:$0]  %s26, 256, %s28, [#allocation6], 128, 128, 8
    $region9: #{tpu_custom_call.1} parent=1 // pred_fallthru
      _
    // Predicated region
    $region10: #{tpu_custom_call.1} parent=1 // pred_check
      _
    $region11: #{tpu_custom_call.1} parent=1 // pred_check_branch
      %35 = sbr.rel (0) target = $region13
    $region12: #{tpu_custom_call.1} parent=1 // pred_region
      %37 = dma.done [#allocation3], 64
    $region13: #{tpu_custom_call.1} parent=1 // pred_fallthru
      _
    // Predicated region
    $region14: #{tpu_custom_call.1} parent=1 // pred_check
      _
    $region15: #{tpu_custom_call.1} parent=1 // pred_check_branch
      %39 = sbr.rel (0) target = $region17
    $region16: #{tpu_custom_call.1} parent=1 // pred_region
      %41 = dma.done [#allocation6], 256
    $region17: #{tpu_custom_call.1} parent=1 // pred_fallthru
      _
    %v42 = vld [vmem:[#allocation2] sm:$0xf]
    %v43 = vld [vmem:[#allocation5] sm:$0xff]
    %v44 = vld [vmem:[#allocation5 + $0x8] sm:$0xf]
    %46 = vset.pattern.permute.xlu0 0
    %47 = vperm.xlu0 %46, %v42
    %v48 = vpop.permute.xlu0 %47
    %v50 = vperm.slane %v43, 0
    %v51 = vmul.f32 %v48, %v50
    %52 = vset.pattern.permute.xlu0 1
    %53 = vperm.xlu0 %52, %v42
    %v54 = vpop.permute.xlu0 %53
    %v56 = vperm.slane %v43, 1
    %v57 = vmul.f32 %v54, %v56
    %v58 = vadd.f32 %v51, %v57
    %59 = vset.pattern.permute.xlu0 2
    %60 = vperm.xlu0 %59, %v42
    %v61 = vpop.permute.xlu0 %60
    %v63 = vperm.slane %v43, 2
    %v64 = vmul.f32 %v61, %v63
    %v65 = vadd.f32 %v58, %v64
    %66 = vset.pattern.permute.xlu0 3
    %67 = vperm.xlu0 %66, %v42
    %v68 = vpop.permute.xlu0 %67
    %v70 = vperm.slane %v43, 3
    %v71 = vmul.f32 %v68, %v70
    %v72 = vadd.f32 %v65, %v71
    %73 = vset.pattern.permute.xlu0 4
    %74 = vperm.xlu0 %73, %v42
    %v75 = vpop.permute.xlu0 %74
    %v77 = vperm.slane %v43, 4
    %v78 = vmul.f32 %v75, %v77
    %v79 = vadd.f32 %v72, %v78
    %80 = vset.pattern.permute.xlu0 5
    %81 = vperm.xlu0 %80, %v42
    %v82 = vpop.permute.xlu0 %81
    %v84 = vperm.slane %v43, 5
    %v85 = vmul.f32 %v82, %v84
    %v86 = vadd.f32 %v79, %v85
    %87 = vset.pattern.permute.xlu0 6
    %88 = vperm.xlu0 %87, %v42
    %v89 = vpop.permute.xlu0 %88
    %v91 = vperm.slane %v43, 6
    %v92 = vmul.f32 %v89, %v91
    %v93 = vadd.f32 %v86, %v92
    %94 = vset.pattern.permute.xlu0 7
    %95 = vperm.xlu0 %94, %v42
    %v96 = vpop.permute.xlu0 %95
    %v98 = vperm.slane %v43, 7
    %v99 = vmul.f32 %v96, %v98
    %v100 = vadd.f32 %v93, %v99
    %101 = vset.pattern.permute.xlu0 8
    %102 = vperm.xlu0 %101, %v42
    %v103 = vpop.permute.xlu0 %102
    %v105 = vperm.slane %v44, 0
    %v106 = vmul.f32 %v103, %v105
    %v107 = vadd.f32 %v100, %v106
    %108 = vset.pattern.permute.xlu0 9
    %109 = vperm.xlu0 %108, %v42
    %v110 = vpop.permute.xlu0 %109
    %v112 = vperm.slane %v44, 1
    %v113 = vmul.f32 %v110, %v112
    %v114 = vadd.f32 %v107, %v113
    %115 = vset.pattern.permute.xlu0 10
    %116 = vperm.xlu0 %115, %v42
    %v117 = vpop.permute.xlu0 %116
    %v119 = vperm.slane %v44, 2
    %v120 = vmul.f32 %v117, %v119
    %v121 = vadd.f32 %v114, %v120
    %122 = vset.pattern.permute.xlu0 11
    %123 = vperm.xlu0 %122, %v42
    %v124 = vpop.permute.xlu0 %123
    %v126 = vperm.slane %v44, 3
    %v127 = vmul.f32 %v124, %v126
    %v128 = vadd.f32 %v121, %v127
    %129 = vst [vmem:[#allocation7] sm:$0xf] %v128
    // Predicated region
    $region18: #{tpu_custom_call.1} parent=1 // pred_check
      _
    $region19: #{tpu_custom_call.1} parent=1 // pred_check_branch
      %131 = sbr.rel (0) target = $region21
    $region20: #{tpu_custom_call.1} parent=1 // pred_region
      %133 = vsyncadd [#allocation4], 0
      %s135 = sshll.u32 [#allocation7], 4
      %s136 = int_to_ptr.vmem [resolvable:$true] %s135
      %s137 = sshll.u32 %s2, 4
      %s138 = int_to_ptr.hbm [resolvable:$true] %s137
      %140 = dma.vmem_to_hbm [thread:$0]  %s136, 64, %s138, [#allocation4]
    $region21: #{tpu_custom_call.1} parent=1 // pred_fallthru
      _
    // Predicated region
    $region22: #{tpu_custom_call.1} parent=1 // pred_check
      _
    $region23: #{tpu_custom_call.1} parent=1 // pred_check_branch
      %142 = sbr.rel (0) target = $region25
    $region24: #{tpu_custom_call.1} parent=1 // pred_region
      %144 = dma.done [#allocation4], 64
    $region25: #{tpu_custom_call.1} parent=1 // pred_fallthru
      _
    %145 = vsyncpa [#allocation3], 1
    %146 = vsyncpa [#allocation6], 1
    %147 = vsyncpa [#allocation4], 1

</llo_original>
